<compile_context>
chip_gen: v7x
topology: tpu7x:2x2x1
jax: 0.10.0
libtpu: 0.0.40
codegen_flags: <defaults>
</compile_context>

<pallas_src>
import jax
import jax.numpy as jnp
from jax.experimental import pallas as pl
from jax.experimental.pallas import tpu as pltpu


def _conv1x1_kernel_2d(x_ref, w_ref, b_ref, o_ref):
    """One (Cout, thw) output tile in native NCHW order (batch dim squeezed).

    x_ref: (Cin, thw)   w_ref: (Cout, Cin)   b_ref: (Cout, 1)   o_ref: (Cout, thw)
    """
    o_ref[...] = (
        jnp.dot(
            w_ref[...],
            x_ref[...],
            preferred_element_type=jnp.float32,
            precision=jax.lax.Precision.DEFAULT,
        )
        + b_ref[...]
    ).astype(o_ref.dtype)


def _conv1x1_kernel_batched(x_ref, w_ref, b_ref, o_ref):
    """Small-HW path: several batches per grid step, statically unrolled.

    x_ref: (tB, Cin, HW)   w_ref: (Cout, Cin)   b_ref: (Cout, 1)   o_ref: (tB, Cout, HW)
    """
    w = w_ref[...]
    b = b_ref[...]
    for i in range(x_ref.shape[0]):  # static unroll (tB is small by construction)
        o_ref[i] = (
            jnp.dot(
                w,
                x_ref[i],
                preferred_element_type=jnp.float32,
                precision=jax.lax.Precision.DEFAULT,
            )
            + b
        ).astype(o_ref.dtype)


def conv1x1_pallas(x3, w, b):
    """x3: (B, Cin, HW) NCHW-flattened.  w: (Cout, Cin).  b: (Cout, 1).
    Returns (B, Cout, HW)."""
    B, Cin, HW = x3.shape
    Cout = w.shape[0]

    cost = pl.CostEstimate(
        flops=2 * B * Cout * Cin * HW,
        transcendentals=0,
        bytes_accessed=4 * (B * Cin * HW + B * Cout * HW + Cout * Cin + Cout),
    )
    compiler_params_2d = pltpu.CompilerParams(
        dimension_semantics=("parallel", "parallel"),
        # <= ~16.5 MiB live (double-buffered 8 MiB x tile + out + resident weight/bias);
        # 32 MiB scoped limit is safe on v5e/v6e (128 MiB VMEM) and v7x (64 MiB).
        vmem_limit_bytes=32 << 20,
    )

    if HW >= 128:
        # --- Lane-dense pixel-tiled path ---
        thw = HW if HW <= 2048 else 2048
        grid_hw = pl.cdiv(HW, thw)
        if B * grid_hw < 2 and HW >= 256:
            # v7x megacore: make sure both TensorCores get a grid step; the extra
            # step (~0.35us) is noise on single-TC chips.
            thw = pl.cdiv(pl.cdiv(HW, 2), 128) * 128
            grid_hw = pl.cdiv(HW, thw)
        grid = (B, grid_hw)

        return pl.pallas_call(
            _conv1x1_kernel_2d,
            out_shape=jax.ShapeDtypeStruct((B, Cout, HW), x3.dtype),
            grid_spec=pltpu.PrefetchScalarGridSpec(
                num_scalar_prefetch=0,
                grid=grid,
                in_specs=[
                    # x tile: batch squeezed, full channel axis, lane-dense pixel tile.
                    # Ragged last tile is clipped by Pallas (no wrapper pad needed).
                    pl.BlockSpec((None, Cin, thw), lambda bi, j: (bi, 0, j)),
                    # Whole weight, resident across the grid (constant index_map).
                    pl.BlockSpec((Cout, Cin), lambda bi, j: (0, 0)),
                    # Bias, resident.
                    pl.BlockSpec((Cout, 1), lambda bi, j: (0, 0)),
                ],
                out_specs=pl.BlockSpec((None, Cout, thw), lambda bi, j: (bi, 0, j)),
            ),
            compiler_params=compiler_params_2d,
            cost_estimate=cost,
        )(x3, w, b)

    # --- Small-HW path (HW < 128): fold batches into one grid step ---
    tb_cap = max(1, (8 * 1024 * 1024) // (Cin * HW * 4))  # ~8 MiB x tile
    tb = min(B, tb_cap, 16)  # 16 caps the static unroll
    if pl.cdiv(B, tb) < 2 and B >= 2:
        tb = pl.cdiv(B, 2)  # v7x megacore: >= 2 parallel steps when possible
    grid = (pl.cdiv(B, tb),)

    return pl.pallas_call(
        _conv1x1_kernel_batched,
        out_shape=jax.ShapeDtypeStruct((B, Cout, HW), x3.dtype),
        grid_spec=pltpu.PrefetchScalarGridSpec(
            num_scalar_prefetch=0,
            grid=grid,
            in_specs=[
                pl.BlockSpec((tb, Cin, HW), lambda bi: (bi, 0, 0)),
                pl.BlockSpec((Cout, Cin), lambda bi: (0, 0)),
                pl.BlockSpec((Cout, 1), lambda bi: (0, 0)),
            ],
            out_specs=pl.BlockSpec((tb, Cout, HW), lambda bi: (bi, 0, 0)),
        ),
        compiler_params=pltpu.CompilerParams(
            dimension_semantics=("parallel",),
            vmem_limit_bytes=32 << 20,
        ),
        cost_estimate=cost,
    )(x3, w, b)


def cnn_attention_reduce(x, w_conv, b_conv):
    """Forward pass of CNN_AttentionReduce.

    x:      (B, 32, 32, H, W) float32
    w_conv: (Cout, 1024, 1, 1) conv weight (PyTorch layout)
    b_conv: (Cout,)            conv bias
    returns (B, Cout, H, W)
    """
    B, c1, c2, H, W = x.shape
    Cin = c1 * c2
    Cout = w_conv.shape[0]

    # Contiguous reshapes only — no transposes, no extra HBM round trips.
    x3 = x.reshape(B, Cin, H * W)
    w_mat = w_conv.reshape(Cout, Cin)
    b_mat = b_conv.reshape(Cout, 1)

    out = conv1x1_pallas(x3, w_mat, b_mat)
    return out.reshape(B, Cout, H, W)


def _reference(x, w_conv, b_conv):
    B, c1, c2, H, W = x.shape
    Cin = c1 * c2
    Cout = w_conv.shape[0]
    x_nchw = x.reshape(B, Cin, H, W)
    return (
        jnp.einsum("bchw,oc->bohw", x_nchw, w_conv.reshape(Cout, Cin))
        + b_conv[None, :, None, None]
    )


if __name__ == "__main__":
    key = jax.random.PRNGKey(0)
    kx, kw, kb, kx2 = jax.random.split(key, 4)

    Cin = 32 * 32
    Cout = 16

    # Deterministic synthetic Conv2d(1024, Cout, kernel_size=1) parameters.
    w_conv = jax.random.normal(kw, (Cout, Cin, 1, 1), dtype=jnp.float32) * 0.02
    b_conv = jax.random.normal(kb, (Cout,), dtype=jnp.float32) * 0.02

    fwd = jax.jit(cnn_attention_reduce)

    # Test 1: small-HW path (B=2, 8x8 -> HW=64 < 128, batch-folded kernel).
    x1 = jax.random.normal(kx, (2, 32, 32, 8, 8), dtype=jnp.float32)
    out1 = jax.block_until_ready(fwd(x1, w_conv, b_conv))
    ref1 = _reference(x1, w_conv, b_conv)
    assert out1.shape == (2, Cout, 8, 8)
    assert jnp.allclose(out1, ref1, atol=2e-3, rtol=2e-3)

    # Test 2: lane-dense tiled path with a ragged pixel edge (HW=2304 -> 2048 + 256).
    x2 = jax.random.normal(kx2, (1, 32, 32, 48, 48), dtype=jnp.float32)
    out2 = jax.block_until_ready(fwd(x2, w_conv, b_conv))
    ref2 = _reference(x2, w_conv, b_conv)
    assert out2.shape == (1, Cout, 48, 48)
    assert jnp.allclose(out2, ref2, atol=2e-3, rtol=2e-3)

    print("KERNEL_OK")
</pallas_src>

<mosaic_0001>
module attributes {stable_mosaic.version = 11 : i64} {
  func.func @_conv1x1_kernel_batched(%arg0: i32, %arg1: memref<1x1024x64xf32, #tpu.memory_space<vmem>>, %arg2: memref<16x1024xf32, #tpu.memory_space<vmem>>, %arg3: memref<16x1xf32, #tpu.memory_space<vmem>>, %arg4: memref<1x16x64xf32, #tpu.memory_space<vmem>>) attributes {dimension_semantics = [#tpu.dimension_semantics<parallel>], iteration_bounds = array<i64: 2>, scalar_prefetch = 0 : i64, scratch_operands = 0 : i64, tpu.core_type = #tpu.core_type<tc>, window_params = [{transform_indices = @transform_0, window_bounds = array<i64: 1, 1024, 64>}, {pipeline_mode = #tpu.pipeline_mode<synchronous>, transform_indices = @transform_1, window_bounds = array<i64: 16, 1024>}, {pipeline_mode = #tpu.pipeline_mode<synchronous>, transform_indices = @transform_2, window_bounds = array<i64: 16, 1>}, {transform_indices = @transform_3, window_bounds = array<i64: 1, 16, 64>}]} {
    %c0 = arith.constant 0 : index
    %c0_0 = arith.constant 0 : index
    %0 = vector.load %arg2[%c0, %c0_0] : memref<16x1024xf32, #tpu.memory_space<vmem>>, vector<16x1024xf32>
    %c0_1 = arith.constant 0 : index
    %c0_2 = arith.constant 0 : index
    %1 = vector.load %arg3[%c0_1, %c0_2] : memref<16x1xf32, #tpu.memory_space<vmem>>, vector<16x1xf32>
    %c0_3 = arith.constant 0 : index
    %c0_4 = arith.constant 0 : index
    %c0_5 = arith.constant 0 : index
    %2 = vector.load %arg1[%c0_3, %c0_4, %c0_5] : memref<1x1024x64xf32, #tpu.memory_space<vmem>>, vector<1x1024x64xf32>
    %3 = vector.shape_cast %2 : vector<1x1024x64xf32> to vector<1024x64xf32>
    %cst = arith.constant dense<0.000000e+00> : vector<16x64xf32>
    %4 = tpu.matmul %0, %3, %cst {dimension_numbers = #tpu.dot_dimension_numbers<[1], [0], [0], [1], [0, 0, 1, 1], [], []>} : vector<16x1024xf32>, vector<1024x64xf32>, vector<16x64xf32> -> vector<16x64xf32>
    %5 = vector.broadcast %1 : vector<16x1xf32> to vector<16x64xf32>
    %6 = arith.addf %4, %5 : vector<16x64xf32>
    %c0_6 = arith.constant 0 : index
    %c0_7 = arith.constant 0 : index
    %c0_8 = arith.constant 0 : index
    %7 = vector.load %arg4[%c0_6, %c0_7, %c0_8] : memref<1x16x64xf32, #tpu.memory_space<vmem>>, vector<1x16x64xf32>
    %8 = vector.shape_cast %7 : vector<1x16x64xf32> to vector<16x64xf32>
    %9 = vector.shape_cast %6 : vector<16x64xf32> to vector<1x16x64xf32>
    tpu.vector_store %arg4[%c0_6, %c0_7, %c0_8], %9 {strides = array<i32>} : memref<1x16x64xf32, #tpu.memory_space<vmem>>, vector<1x16x64xf32>,
    return
  }
  func.func @transform_0(%arg0: i32) -> (i32, i32, i32) {
    %c0_i32 = arith.constant 0 : i32
    %c0_i32_0 = arith.constant 0 : i32
    %c0_i32_1 = arith.constant 0 : i32
    return %arg0, %c0_i32, %c0_i32_0 : i32, i32, i32
  }
  func.func @transform_1(%arg0: i32) -> (i32, i32) {
    %c0_i32 = arith.constant 0 : i32
    %c0_i32_0 = arith.constant 0 : i32
    %c0_i32_1 = arith.constant 0 : i32
    return %c0_i32, %c0_i32_0 : i32, i32
  }
  func.func @transform_2(%arg0: i32) -> (i32, i32) {
    %c0_i32 = arith.constant 0 : i32
    %c0_i32_0 = arith.constant 0 : i32
    %c0_i32_1 = arith.constant 0 : i32
    return %c0_i32, %c0_i32_0 : i32, i32
  }
  func.func @transform_3(%arg0: i32) -> (i32, i32, i32) {
    %c0_i32 = arith.constant 0 : i32
    %c0_i32_0 = arith.constant 0 : i32
    %c0_i32_1 = arith.constant 0 : i32
    return %arg0, %c0_i32, %c0_i32_0 : i32, i32, i32
  }
}

</mosaic_0001>

<llo_original>
// kernel: cnn_attention_reduce.1
$region0: #{cnn_attention_reduce.1}
  #allocation0 [shape = 'u32[]', space=smem, size = 0x4, offset = 0x4, fixed_abs, tag = 'smem constant byte address 0x4 - core index']
  #allocation1 [shape = 'u32[144,128]{1,0:T(1,128)}', space=vmem, size = 0x12000, scoped, tag = 'internal scratch']
  %s0 = inlined_call_operand.vmem [shape: f32[2,1024,64], index: 0, kind: input, shape index: {}]
  %s1 = inlined_call_operand.vmem [shape: f32[16,1024], index: 1, kind: input, shape index: {}]
  %s2 = inlined_call_operand.vmem [shape: f32[16,1], index: 2, kind: input, shape index: {}]
  %s3 = inlined_call_operand.vmem [shape: f32[2,16,64], index: 3, kind: output, shape index: {}]
  %s4 = sld [smem:[#allocation0]]
  $region45: #{cnn_attention_reduce.1} parent=0
    _
  %s6 = ssub.s32 1, %s4
  %s7 = scalar_select 0, %s6, %s4
  loop: start=0, step=1, limit=4
  $region2: #{cnn_attention_reduce.1} parent=0 // loop_pre_header
    _
  $region3: #{cnn_attention_reduce.1} parent=0 // loop_header
    %s9 = sphi 0, %s13
    %p10 = scmp.ge.s32.totalorder %s9, 4
    %s19 = sphi 0, %s21
    %s22 = sphi 0, %s19
    %s23 = sphi 0, %s22
    %s39 = sphi 0, %s23
    %s43 = sphi 0, %s43
    %s45 = sphi 0, %s43
    %s46 = sphi 0, %s45
    %s60 = sphi 0, %s46
    %s64 = sphi 0, %s64
    %s66 = sphi 0, %s64
    %s67 = sphi 0, %s66
    %s81 = sphi 0, %s67
    %s87 = sphi 0, %s89
    %s90 = sphi 0, %s87
    %s91 = sphi 0, %s90
    %s107 = sphi 0, %s91
  $region4: #{cnn_attention_reduce.1} parent=0 // loop_header_branch
    %12 = sbr.rel (%p10) target = $region8
  $region5: #{cnn_attention_reduce.1} parent=0 // loop_body
    %s14 = ssub.s32 %s9, 1
    %s15 = ssub.s32 %s9, 2
    %s16 = sadd.s32 %s9, 1
    %s17 = ssub.s32 %s9, %s16
    %p18 = scmp.eq.s32.totalorder %s17, 0
    %s20 = sadd.s32 %s19, 1
    %s21 = scalar_select %p18, %s19, %s20
    %p24 = pneg %p18
    %p25 = scmp.eq.s32.totalorder %s9, 1
    %p26 = por %p24, %p25
    %p27 = scmp.ne.s32.totalorder %s19, %s22
    %p28 = scmp.eq.s32.totalorder %s9, 0
    %p29 = por %p27, %p28
    %p30 = scmp.ne.s32.totalorder %s19, %s22
    %p31 = scmp.eq.s32.totalorder %s14, 1
    %p32 = por %p30, %p31
    %p33 = scmp.ne.s32.totalorder %s22, %s23
    %p34 = scmp.eq.s32.totalorder %s14, 0
    %p35 = por %p33, %p34
    %p36 = scmp.ne.s32.totalorder %s22, %s23
    %p37 = scmp.eq.s32.totalorder %s15, 1
    %p38 = por %p36, %p37
    %p40 = scmp.ne.s32.totalorder %s23, %s39
    %p41 = scmp.eq.s32.totalorder %s15, 0
    %p42 = por %p40, %p41
    %s44 = sadd.s32 %s43, 1
    %p47 = scmp.eq.s32.totalorder %s9, 1
    %p48 = scmp.ne.s32.totalorder %s43, %s45
    %p49 = scmp.eq.s32.totalorder %s9, 0
    %p50 = por %p48, %p49
    %p51 = scmp.ne.s32.totalorder %s43, %s45
    %p52 = scmp.eq.s32.totalorder %s14, 1
    %p53 = por %p51, %p52
    %p54 = scmp.ne.s32.totalorder %s45, %s46
    %p55 = scmp.eq.s32.totalorder %s14, 0
    %p56 = por %p54, %p55
    %p57 = scmp.ne.s32.totalorder %s45, %s46
    %p58 = scmp.eq.s32.totalorder %s15, 1
    %p59 = por %p57, %p58
    %p61 = scmp.ne.s32.totalorder %s46, %s60
    %p62 = scmp.eq.s32.totalorder %s15, 0
    %p63 = por %p61, %p62
    %s65 = sadd.s32 %s64, 1
    %p68 = scmp.eq.s32.totalorder %s9, 1
    %p69 = scmp.ne.s32.totalorder %s64, %s66
    %p70 = scmp.eq.s32.totalorder %s9, 0
    %p71 = por %p69, %p70
    %p72 = scmp.ne.s32.totalorder %s64, %s66
    %p73 = scmp.eq.s32.totalorder %s14, 1
    %p74 = por %p72, %p73
    %p75 = scmp.ne.s32.totalorder %s66, %s67
    %p76 = scmp.eq.s32.totalorder %s14, 0
    %p77 = por %p75, %p76
    %p78 = scmp.ne.s32.totalorder %s66, %s67
    %p79 = scmp.eq.s32.totalorder %s15, 1
    %p80 = por %p78, %p79
    %p82 = scmp.ne.s32.totalorder %s67, %s81
    %p83 = scmp.eq.s32.totalorder %s15, 0
    %p84 = por %p82, %p83
    %s85 = ssub.s32 %s9, %s16
    %p86 = scmp.eq.s32.totalorder %s85, 0
    %s88 = sadd.s32 %s87, 1
    %s89 = scalar_select %p86, %s87, %s88
    %p92 = pneg %p86
    %p93 = scmp.eq.s32.totalorder %s9, 1
    %p94 = por %p92, %p93
    %p95 = scmp.ne.s32.totalorder %s87, %s90
    %p96 = scmp.eq.s32.totalorder %s9, 0
    %p97 = por %p95, %p96
    %p98 = scmp.ne.s32.totalorder %s87, %s90
    %p99 = scmp.eq.s32.totalorder %s14, 1
    %p100 = por %p98, %p99
    %p101 = scmp.ne.s32.totalorder %s90, %s91
    %p102 = scmp.eq.s32.totalorder %s14, 0
    %p103 = por %p101, %p102
    %p104 = scmp.ne.s32.totalorder %s90, %s91
    %p105 = scmp.eq.s32.totalorder %s15, 1
    %p106 = por %p104, %p105
    %p108 = scmp.ne.s32.totalorder %s91, %s107
    %p109 = scmp.eq.s32.totalorder %s15, 0
    %p110 = por %p108, %p109
    %p111 = scmp.le.s32.totalorder 1, %s9
    %p112 = scmp.lt.s32.totalorder %s9, 3
    %p113 = pnand %p111, %p112
    %p114 = pneg %p113
    // Predicated region
    $region9: #{cnn_attention_reduce.1} parent=5 // pred_check
      _
    $region10: #{cnn_attention_reduce.1} parent=5 // pred_check_branch
      %116 = sbr.rel (%p113) target = $region12
    $region11: #{cnn_attention_reduce.1} parent=5 // pred_region
      %s117 = ssub.s32 %s9, 1
      // Predicated region
      $region13: #{cnn_attention_reduce.1} parent=11 // pred_check
        %p118 = pneg %p56
      $region14: #{cnn_attention_reduce.1} parent=11 // pred_check_branch
        %120 = sbr.rel (%p118) target = $region16
      $region15: #{cnn_attention_reduce.1} parent=11 // pred_region
        _
      $region16: #{cnn_attention_reduce.1} parent=11 // pred_fallthru
        _
      // Predicated region
      $region17: #{cnn_attention_reduce.1} parent=11 // pred_check
        %p121 = pneg %p77
      $region18: #{cnn_attention_reduce.1} parent=11 // pred_check_branch
        %123 = sbr.rel (%p121) target = $region20
      $region19: #{cnn_attention_reduce.1} parent=11 // pred_region
        _
      $region20: #{cnn_attention_reduce.1} parent=11 // pred_fallthru
        _
    $region12: #{cnn_attention_reduce.1} parent=5 // pred_fallthru
      _
    %p124 = scmp.lt.s32.totalorder %s9, 2
    // Predicated region
    $region21: #{cnn_attention_reduce.1} parent=5 // pred_check
      %p125 = pneg %p124
    $region22: #{cnn_attention_reduce.1} parent=5 // pred_check_branch
      %127 = sbr.rel (%p125) target = $region24
    $region23: #{cnn_attention_reduce.1} parent=5 // pred_region
      // Predicated region
      $region25: #{cnn_attention_reduce.1} parent=23 // pred_check
        %p128 = pneg %p29
      $region26: #{cnn_attention_reduce.1} parent=23 // pred_check_branch
        %130 = sbr.rel (%p128) target = $region28
      $region27: #{cnn_attention_reduce.1} parent=23 // pred_region
        %p131 = scmp.lt.s32.totalorder %s9, 1
        %s132 = scalar_select %p131, %s9, 1
        %s133 = smul.addr %s132, 128
        %s134 = smul.addr %s133, 8
        %s135 = scalar_lea.vmem %s0, %s134
      $region28: #{cnn_attention_reduce.1} parent=23 // pred_fallthru
        _
    $region24: #{cnn_attention_reduce.1} parent=5 // pred_fallthru
      _
    %p136 = scmp.le.s32.totalorder 1, %s9
    %p137 = scmp.lt.s32.totalorder %s9, 3
    %p138 = pnand %p136, %p137
    %p139 = pneg %p138
    // Predicated region
    $region29: #{cnn_attention_reduce.1} parent=5 // pred_check
      _
    $region30: #{cnn_attention_reduce.1} parent=5 // pred_check_branch
      %141 = sbr.rel (%p138) target = $region32
    $region31: #{cnn_attention_reduce.1} parent=5 // pred_region
      %s142 = ssub.s32 %s9, 1
      %p143 = scmp.lt.s32.totalorder %s14, 1
      %s144 = scalar_select %p143, %s14, 1
      %s145 = smul.addr %s144, 128
      %s146 = smul.addr %s145, 8
      %s147 = scalar_lea.vmem %s0, %s146
      %p148 = pneg %p35
      %p149 = pneg %p32
      %p150 = pneg %p56
      %p151 = pneg %p53
      %p152 = pneg %p77
      %p153 = pneg %p74
      %p154 = pneg %p103
      %p155 = pneg %p100
      %p156 = scmp.lt.s32.totalorder %s14, 1
      %s157 = scalar_select %p156, %s14, 1
      %s158 = smul.addr %s157, 2
      %s159 = smul.addr %s158, 8
      %s160 = scalar_lea.vmem %s3, %s159
      %p161 = scmp.lt.s32.totalorder %s14, 1
      %s162 = scalar_select %p161, %s14, 1
      %s163 = smul.addr %s162, 128
      %s164 = smul.addr %s163, 8
      %s165 = scalar_lea.vmem %s0, %s164
      %p166 = scmp.lt.s32.totalorder %s14, 1
      %s167 = scalar_select %p166, %s14, 1
      %s168 = smul.addr %s167, 2
      %s169 = smul.addr %s168, 8
      %s170 = scalar_lea.vmem %s3, %s169
      %v171 = vld [vmem:[%s1] sm:$0xff]
      %v172 = vld [vmem:[%s1 + $0x8] sm:$0xff]
      %v173 = vld [vmem:[%s1 + $0x10] sm:$0xff]
      %v174 = vld [vmem:[%s1 + $0x18] sm:$0xff]
      %v175 = vld [vmem:[%s1 + $0x20] sm:$0xff]
      %v176 = vld [vmem:[%s1 + $0x28] sm:$0xff]
      %v177 = vld [vmem:[%s1 + $0x30] sm:$0xff]
      %v178 = vld [vmem:[%s1 + $0x38] sm:$0xff]
      %v179 = vld [vmem:[%s1 + $0x40] sm:$0xff]
      %v180 = vld [vmem:[%s1 + $0x48] sm:$0xff]
      %v181 = vld [vmem:[%s1 + $0x50] sm:$0xff]
      %v182 = vld [vmem:[%s1 + $0x58] sm:$0xff]
      %v183 = vld [vmem:[%s1 + $0x60] sm:$0xff]
      %v184 = vld [vmem:[%s1 + $0x68] sm:$0xff]
      %v185 = vld [vmem:[%s1 + $0x70] sm:$0xff]
      %v186 = vld [vmem:[%s1 + $0x78] sm:$0xff]
      %v187 = vld [vmem:[%s2] sm:$0xff]
      %v188 = vld [vmem:[%s2 + $0x8] sm:$0xff]
      %v189 = vld [vmem:[%s165] sm:$0xff]
      %v190 = vld [vmem:[%s165 + $0x8] sm:$0xff]
      %v191 = vld [vmem:[%s165 + $0x10] sm:$0xff]
      %v192 = vld [vmem:[%s165 + $0x18] sm:$0xff]
      %v193 = vld [vmem:[%s165 + $0x20] sm:$0xff]
      %v194 = vld [vmem:[%s165 + $0x28] sm:$0xff]
      %v195 = vld [vmem:[%s165 + $0x30] sm:$0xff]
      %v196 = vld [vmem:[%s165 + $0x38] sm:$0xff]
      %v197 = vld [vmem:[%s165 + $0x40] sm:$0xff]
      %v198 = vld [vmem:[%s165 + $0x48] sm:$0xff]
      %v199 = vld [vmem:[%s165 + $0x50] sm:$0xff]
      %v200 = vld [vmem:[%s165 + $0x58] sm:$0xff]
      %v201 = vld [vmem:[%s165 + $0x60] sm:$0xff]
      %v202 = vld [vmem:[%s165 + $0x68] sm:$0xff]
      %v203 = vld [vmem:[%s165 + $0x70] sm:$0xff]
      %v204 = vld [vmem:[%s165 + $0x78] sm:$0xff]
      %v205 = vld [vmem:[%s165 + $0x80] sm:$0xff]
      %v206 = vld [vmem:[%s165 + $0x88] sm:$0xff]
      %v207 = vld [vmem:[%s165 + $0x90] sm:$0xff]
      %v208 = vld [vmem:[%s165 + $0x98] sm:$0xff]
      %v209 = vld [vmem:[%s165 + $0xa0] sm:$0xff]
      %v210 = vld [vmem:[%s165 + $0xa8] sm:$0xff]
      %v211 = vld [vmem:[%s165 + $0xb0] sm:$0xff]
      %v212 = vld [vmem:[%s165 + $0xb8] sm:$0xff]
      %v213 = vld [vmem:[%s165 + $0xc0] sm:$0xff]
      %v214 = vld [vmem:[%s165 + $0xc8] sm:$0xff]
      %v215 = vld [vmem:[%s165 + $0xd0] sm:$0xff]
      %v216 = vld [vmem:[%s165 + $0xd8] sm:$0xff]
      %v217 = vld [vmem:[%s165 + $0xe0] sm:$0xff]
      %v218 = vld [vmem:[%s165 + $0xe8] sm:$0xff]
      %v219 = vld [vmem:[%s165 + $0xf0] sm:$0xff]
      %v220 = vld [vmem:[%s165 + $0xf8] sm:$0xff]
      %v221 = vld [vmem:[%s165 + $0x100] sm:$0xff]
      %v222 = vld [vmem:[%s165 + $0x108] sm:$0xff]
      %v223 = vld [vmem:[%s165 + $0x110] sm:$0xff]
      %v224 = vld [vmem:[%s165 + $0x118] sm:$0xff]
      %v225 = vld [vmem:[%s165 + $0x120] sm:$0xff]
      %v226 = vld [vmem:[%s165 + $0x128] sm:$0xff]
      %v227 = vld [vmem:[%s165 + $0x130] sm:$0xff]
      %v228 = vld [vmem:[%s165 + $0x138] sm:$0xff]
      %v229 = vld [vmem:[%s165 + $0x140] sm:$0xff]
      %v230 = vld [vmem:[%s165 + $0x148] sm:$0xff]
      %v231 = vld [vmem:[%s165 + $0x150] sm:$0xff]
      %v232 = vld [vmem:[%s165 + $0x158] sm:$0xff]
      %v233 = vld [vmem:[%s165 + $0x160] sm:$0xff]
      %v234 = vld [vmem:[%s165 + $0x168] sm:$0xff]
      %v235 = vld [vmem:[%s165 + $0x170] sm:$0xff]
      %v236 = vld [vmem:[%s165 + $0x178] sm:$0xff]
      %v237 = vld [vmem:[%s165 + $0x180] sm:$0xff]
      %v238 = vld [vmem:[%s165 + $0x188] sm:$0xff]
      %v239 = vld [vmem:[%s165 + $0x190] sm:$0xff]
      %v240 = vld [vmem:[%s165 + $0x198] sm:$0xff]
      %v241 = vld [vmem:[%s165 + $0x1a0] sm:$0xff]
      %v242 = vld [vmem:[%s165 + $0x1a8] sm:$0xff]
      %v243 = vld [vmem:[%s165 + $0x1b0] sm:$0xff]
      %v244 = vld [vmem:[%s165 + $0x1b8] sm:$0xff]
      %v245 = vld [vmem:[%s165 + $0x1c0] sm:$0xff]
      %v246 = vld [vmem:[%s165 + $0x1c8] sm:$0xff]
      %v247 = vld [vmem:[%s165 + $0x1d0] sm:$0xff]
      %v248 = vld [vmem:[%s165 + $0x1d8] sm:$0xff]
      %v249 = vld [vmem:[%s165 + $0x1e0] sm:$0xff]
      %v250 = vld [vmem:[%s165 + $0x1e8] sm:$0xff]
      %v251 = vld [vmem:[%s165 + $0x1f0] sm:$0xff]
      %v252 = vld [vmem:[%s165 + $0x1f8] sm:$0xff]
      %v253 = vld [vmem:[%s165 + $0x200] sm:$0xff]
      %v254 = vld [vmem:[%s165 + $0x208] sm:$0xff]
      %v255 = vld [vmem:[%s165 + $0x210] sm:$0xff]
      %v256 = vld [vmem:[%s165 + $0x218] sm:$0xff]
      %v257 = vld [vmem:[%s165 + $0x220] sm:$0xff]
      %v258 = vld [vmem:[%s165 + $0x228] sm:$0xff]
      %v259 = vld [vmem:[%s165 + $0x230] sm:$0xff]
      %v260 = vld [vmem:[%s165 + $0x238] sm:$0xff]
      %v261 = vld [vmem:[%s165 + $0x240] sm:$0xff]
      %v262 = vld [vmem:[%s165 + $0x248] sm:$0xff]
      %v263 = vld [vmem:[%s165 + $0x250] sm:$0xff]
      %v264 = vld [vmem:[%s165 + $0x258] sm:$0xff]
      %v265 = vld [vmem:[%s165 + $0x260] sm:$0xff]
      %v266 = vld [vmem:[%s165 + $0x268] sm:$0xff]
      %v267 = vld [vmem:[%s165 + $0x270] sm:$0xff]
      %v268 = vld [vmem:[%s165 + $0x278] sm:$0xff]
      %v269 = vld [vmem:[%s165 + $0x280] sm:$0xff]
      %v270 = vld [vmem:[%s165 + $0x288] sm:$0xff]
      %v271 = vld [vmem:[%s165 + $0x290] sm:$0xff]
      %v272 = vld [vmem:[%s165 + $0x298] sm:$0xff]
      %v273 = vld [vmem:[%s165 + $0x2a0] sm:$0xff]
      %v274 = vld [vmem:[%s165 + $0x2a8] sm:$0xff]
      %v275 = vld [vmem:[%s165 + $0x2b0] sm:$0xff]
      %v276 = vld [vmem:[%s165 + $0x2b8] sm:$0xff]
      %v277 = vld [vmem:[%s165 + $0x2c0] sm:$0xff]
      %v278 = vld [vmem:[%s165 + $0x2c8] sm:$0xff]
      %v279 = vld [vmem:[%s165 + $0x2d0] sm:$0xff]
      %v280 = vld [vmem:[%s165 + $0x2d8] sm:$0xff]
      %v281 = vld [vmem:[%s165 + $0x2e0] sm:$0xff]
      %v282 = vld [vmem:[%s165 + $0x2e8] sm:$0xff]
      %v283 = vld [vmem:[%s165 + $0x2f0] sm:$0xff]
      %v284 = vld [vmem:[%s165 + $0x2f8] sm:$0xff]
      %v285 = vld [vmem:[%s165 + $0x300] sm:$0xff]
      %v286 = vld [vmem:[%s165 + $0x308] sm:$0xff]
      %v287 = vld [vmem:[%s165 + $0x310] sm:$0xff]
      %v288 = vld [vmem:[%s165 + $0x318] sm:$0xff]
      %v289 = vld [vmem:[%s165 + $0x320] sm:$0xff]
      %v290 = vld [vmem:[%s165 + $0x328] sm:$0xff]
      %v291 = vld [vmem:[%s165 + $0x330] sm:$0xff]
      %v292 = vld [vmem:[%s165 + $0x338] sm:$0xff]
      %v293 = vld [vmem:[%s165 + $0x340] sm:$0xff]
      %v294 = vld [vmem:[%s165 + $0x348] sm:$0xff]
      %v295 = vld [vmem:[%s165 + $0x350] sm:$0xff]
      %v296 = vld [vmem:[%s165 + $0x358] sm:$0xff]
      %v297 = vld [vmem:[%s165 + $0x360] sm:$0xff]
      %v298 = vld [vmem:[%s165 + $0x368] sm:$0xff]
      %v299 = vld [vmem:[%s165 + $0x370] sm:$0xff]
      %v300 = vld [vmem:[%s165 + $0x378] sm:$0xff]
      %v301 = vld [vmem:[%s165 + $0x380] sm:$0xff]
      %v302 = vld [vmem:[%s165 + $0x388] sm:$0xff]
      %v303 = vld [vmem:[%s165 + $0x390] sm:$0xff]
      %v304 = vld [vmem:[%s165 + $0x398] sm:$0xff]
      %v305 = vld [vmem:[%s165 + $0x3a0] sm:$0xff]
      %v306 = vld [vmem:[%s165 + $0x3a8] sm:$0xff]
      %v307 = vld [vmem:[%s165 + $0x3b0] sm:$0xff]
      %v308 = vld [vmem:[%s165 + $0x3b8] sm:$0xff]
      %v309 = vld [vmem:[%s165 + $0x3c0] sm:$0xff]
      %v310 = vld [vmem:[%s165 + $0x3c8] sm:$0xff]
      %v311 = vld [vmem:[%s165 + $0x3d0] sm:$0xff]
      %v312 = vld [vmem:[%s165 + $0x3d8] sm:$0xff]
      %v313 = vld [vmem:[%s165 + $0x3e0] sm:$0xff]
      %v314 = vld [vmem:[%s165 + $0x3e8] sm:$0xff]
      %v315 = vld [vmem:[%s165 + $0x3f0] sm:$0xff]
      %v316 = vld [vmem:[%s165 + $0x3f8] sm:$0xff]
      %318 = vset.pattern.permute.xlu0 0
      %319 = vperm.xlu0 %318, %v187
      %v320 = vpop.permute.xlu0 %319
      %323 = vset.pattern.permute.xlu0 0
      %324 = vperm.xlu0 %323, %v188
      %v325 = vpop.permute.xlu0 %324
      %327 = vmatprep.subr.mxu0 0.0
      %328 = vmatpush1.msra.mxu0 %v189
      %329 = vmatprep.subr.mxu0 0.0
      %330 = vmatpush1.msra.mxu0 %v190
      %331 = vmatprep.subr.mxu0 0.0
      %332 = vmatpush1.msra.mxu0 %v191
      %333 = vmatprep.subr.mxu0 0.0
      %334 = vmatpush1.msra.mxu0 %v192
      %335 = vmatprep.subr.mxu0 0.0
      %336 = vmatpush1.msra.mxu0 %v193
      %337 = vmatprep.subr.mxu0 0.0
      %338 = vmatpush1.msra.mxu0 %v194
      %339 = vmatprep.subr.mxu0 0.0
      %340 = vmatpush1.msra.mxu0 %v195
      %341 = vmatprep.subr.mxu0 0.0
      %342 = vmatpush1.msra.mxu0 %v196
      %343 = vmatprep.subr.mxu0 0.0
      %344 = vmatpush1.msra.mxu0 %v197
      %345 = vmatprep.subr.mxu0 0.0
      %346 = vmatpush1.msra.mxu0 %v198
      %347 = vmatprep.subr.mxu0 0.0
      %348 = vmatpush1.msra.mxu0 %v199
      %349 = vmatprep.subr.mxu0 0.0
      %350 = vmatpush1.msra.mxu0 %v200
      %351 = vmatprep.subr.mxu0 0.0
      %352 = vmatpush1.msra.mxu0 %v201
      %353 = vmatprep.subr.mxu0 0.0
      %354 = vmatpush1.msra.mxu0 %v202
      %355 = vmatprep.subr.mxu0 0.0
      %356 = vmatpush1.msra.mxu0 %v203
      %357 = vmatprep.subr.mxu0 0.0
      %358 = vmatpush1.msra.mxu0 %v204
      %359 = vmatprep.subr.mxu0 0.0
      %360 = vmatpush1.msra.mxu0 %v205
      %361 = vmatprep.subr.mxu0 0.0
      %362 = vmatpush1.msra.mxu0 %v206
      %363 = vmatprep.subr.mxu0 0.0
      %364 = vmatpush1.msra.mxu0 %v207
      %365 = vmatprep.subr.mxu0 0.0
      %366 = vmatpush1.msra.mxu0 %v208
      %367 = vmatprep.subr.mxu0 0.0
      %368 = vmatpush1.msra.mxu0 %v209
      %369 = vmatprep.subr.mxu0 0.0
      %370 = vmatpush1.msra.mxu0 %v210
      %371 = vmatprep.subr.mxu0 0.0
      %372 = vmatpush1.msra.mxu0 %v211
      %373 = vmatprep.subr.mxu0 0.0
      %374 = vmatpush1.msra.mxu0 %v212
      %375 = vmatprep.subr.mxu0 0.0
      %376 = vmatpush1.msra.mxu0 %v213
      %377 = vmatprep.subr.mxu0 0.0
      %378 = vmatpush1.msra.mxu0 %v214
      %379 = vmatprep.subr.mxu0 0.0
      %380 = vmatpush1.msra.mxu0 %v215
      %381 = vmatprep.subr.mxu0 0.0
      %382 = vmatpush1.msra.mxu0 %v216
      %383 = vmatprep.subr.mxu0 0.0
      %384 = vmatpush1.msra.mxu0 %v217
      %385 = vmatprep.subr.mxu0 0.0
      %386 = vmatpush1.msra.mxu0 %v218
      %387 = vmatprep.subr.mxu0 0.0
      %388 = vmatpush1.msra.mxu0 %v219
      %389 = vmatprep.subr.mxu0 0.0
      %390 = vmatpush1.msra.mxu0 %v220
      %391 = vmatprep.mubr.f32.mxu0 %v172
      %392 = vmatmul.mubr.f32.gmra.mrb[0].mxu0 %v171
      %v393 = vpop.f32.mrb[0].mxu0
      %v394 = vadd.f32 %v320, %v393
      %v395 = vpop.f32.mrb[0].mxu0
      %396 = vmatprep.mubr.f32.mxu0 %v180
      %397 = vmatmul.mubr.f32.gmra.mrb[0].mxu0 %v179
      %v398 = vpop.f32.mrb[0].mxu0
      %v399 = vadd.f32 %v325, %v398
      %v400 = vpop.f32.mrb[0].mxu0
      %401 = vdwg.mxu0
      %402 = vmatprep.subr.mxu0 0.0
      %403 = vmatpush1.msra.mxu0 %v221
      %404 = vmatprep.subr.mxu0 0.0
      %405 = vmatpush1.msra.mxu0 %v222
      %406 = vmatprep.subr.mxu0 0.0
      %407 = vmatpush1.msra.mxu0 %v223
      %408 = vmatprep.subr.mxu0 0.0
      %409 = vmatpush1.msra.mxu0 %v224
      %410 = vmatprep.subr.mxu0 0.0
      %411 = vmatpush1.msra.mxu0 %v225
      %412 = vmatprep.subr.mxu0 0.0
      %413 = vmatpush1.msra.mxu0 %v226
      %414 = vmatprep.subr.mxu0 0.0
      %415 = vmatpush1.msra.mxu0 %v227
      %416 = vmatprep.subr.mxu0 0.0
      %417 = vmatpush1.msra.mxu0 %v228
      %418 = vmatprep.subr.mxu0 0.0
      %419 = vmatpush1.msra.mxu0 %v229
      %420 = vmatprep.subr.mxu0 0.0
      %421 = vmatpush1.msra.mxu0 %v230
      %422 = vmatprep.subr.mxu0 0.0
      %423 = vmatpush1.msra.mxu0 %v231
      %424 = vmatprep.subr.mxu0 0.0
      %425 = vmatpush1.msra.mxu0 %v232
      %426 = vmatprep.subr.mxu0 0.0
      %427 = vmatpush1.msra.mxu0 %v233
      %428 = vmatprep.subr.mxu0 0.0
      %429 = vmatpush1.msra.mxu0 %v234
      %430 = vmatprep.subr.mxu0 0.0
      %431 = vmatpush1.msra.mxu0 %v235
      %432 = vmatprep.subr.mxu0 0.0
      %433 = vmatpush1.msra.mxu0 %v236
      %434 = vmatprep.subr.mxu0 0.0
      %435 = vmatpush1.msra.mxu0 %v237
      %436 = vmatprep.subr.mxu0 0.0
      %437 = vmatpush1.msra.mxu0 %v238
      %438 = vmatprep.subr.mxu0 0.0
      %439 = vmatpush1.msra.mxu0 %v239
      %440 = vmatprep.subr.mxu0 0.0
      %441 = vmatpush1.msra.mxu0 %v240
      %442 = vmatprep.subr.mxu0 0.0
      %443 = vmatpush1.msra.mxu0 %v241
      %444 = vmatprep.subr.mxu0 0.0
      %445 = vmatpush1.msra.mxu0 %v242
      %446 = vmatprep.subr.mxu0 0.0
      %447 = vmatpush1.msra.mxu0 %v243
      %448 = vmatprep.subr.mxu0 0.0
      %449 = vmatpush1.msra.mxu0 %v244
      %450 = vmatprep.subr.mxu0 0.0
      %451 = vmatpush1.msra.mxu0 %v245
      %452 = vmatprep.subr.mxu0 0.0
      %453 = vmatpush1.msra.mxu0 %v246
      %454 = vmatprep.subr.mxu0 0.0
      %455 = vmatpush1.msra.mxu0 %v247
      %456 = vmatprep.subr.mxu0 0.0
      %457 = vmatpush1.msra.mxu0 %v248
      %458 = vmatprep.subr.mxu0 0.0
      %459 = vmatpush1.msra.mxu0 %v249
      %460 = vmatprep.subr.mxu0 0.0
      %461 = vmatpush1.msra.mxu0 %v250
      %462 = vmatprep.subr.mxu0 0.0
      %463 = vmatpush1.msra.mxu0 %v251
      %464 = vmatprep.subr.mxu0 0.0
      %465 = vmatpush1.msra.mxu0 %v252
      %466 = vmatprep.mubr.f32.mxu0 %v174
      %467 = vmatmul.mubr.f32.gmra.mrb[0].mxu0 %v173
      %v468 = vpop.f32.mrb[0].mxu0
      %v469 = vadd.f32 %v394, %v468
      %v470 = vpop.f32.mrb[0].mxu0
      %471 = vmatprep.mubr.f32.mxu0 %v182
      %472 = vmatmul.mubr.f32.gmra.mrb[0].mxu0 %v181
      %v473 = vpop.f32.mrb[0].mxu0
      %v474 = vadd.f32 %v399, %v473
      %v475 = vpop.f32.mrb[0].mxu0
      %476 = vdwg.mxu0
      %477 = vmatprep.subr.mxu0 0.0
      %478 = vmatpush1.msra.mxu0 %v253
      %479 = vmatprep.subr.mxu0 0.0
      %480 = vmatpush1.msra.mxu0 %v254
      %481 = vmatprep.subr.mxu0 0.0
      %482 = vmatpush1.msra.mxu0 %v255
      %483 = vmatprep.subr.mxu0 0.0
      %484 = vmatpush1.msra.mxu0 %v256
      %485 = vmatprep.subr.mxu0 0.0
      %486 = vmatpush1.msra.mxu0 %v257
      %487 = vmatprep.subr.mxu0 0.0
      %488 = vmatpush1.msra.mxu0 %v258
      %489 = vmatprep.subr.mxu0 0.0
      %490 = vmatpush1.msra.mxu0 %v259
      %491 = vmatprep.subr.mxu0 0.0
      %492 = vmatpush1.msra.mxu0 %v260
      %493 = vmatprep.subr.mxu0 0.0
      %494 = vmatpush1.msra.mxu0 %v261
      %495 = vmatprep.subr.mxu0 0.0
      %496 = vmatpush1.msra.mxu0 %v262
      %497 = vmatprep.subr.mxu0 0.0
      %498 = vmatpush1.msra.mxu0 %v263
      %499 = vmatprep.subr.mxu0 0.0
      %500 = vmatpush1.msra.mxu0 %v264
      %501 = vmatprep.subr.mxu0 0.0
      %502 = vmatpush1.msra.mxu0 %v265
      %503 = vmatprep.subr.mxu0 0.0
      %504 = vmatpush1.msra.mxu0 %v266
      %505 = vmatprep.subr.mxu0 0.0
      %506 = vmatpush1.msra.mxu0 %v267
      %507 = vmatprep.subr.mxu0 0.0
      %508 = vmatpush1.msra.mxu0 %v268
      %509 = vmatprep.subr.mxu0 0.0
      %510 = vmatpush1.msra.mxu0 %v269
      %511 = vmatprep.subr.mxu0 0.0
      %512 = vmatpush1.msra.mxu0 %v270
      %513 = vmatprep.subr.mxu0 0.0
      %514 = vmatpush1.msra.mxu0 %v271
      %515 = vmatprep.subr.mxu0 0.0
      %516 = vmatpush1.msra.mxu0 %v272
      %517 = vmatprep.subr.mxu0 0.0
      %518 = vmatpush1.msra.mxu0 %v273
      %519 = vmatprep.subr.mxu0 0.0
      %520 = vmatpush1.msra.mxu0 %v274
      %521 = vmatprep.subr.mxu0 0.0
      %522 = vmatpush1.msra.mxu0 %v275
      %523 = vmatprep.subr.mxu0 0.0
      %524 = vmatpush1.msra.mxu0 %v276
      %525 = vmatprep.subr.mxu0 0.0
      %526 = vmatpush1.msra.mxu0 %v277
      %527 = vmatprep.subr.mxu0 0.0
      %528 = vmatpush1.msra.mxu0 %v278
      %529 = vmatprep.subr.mxu0 0.0
      %530 = vmatpush1.msra.mxu0 %v279
      %531 = vmatprep.subr.mxu0 0.0
      %532 = vmatpush1.msra.mxu0 %v280
      %533 = vmatprep.subr.mxu0 0.0
      %534 = vmatpush1.msra.mxu0 %v281
      %535 = vmatprep.subr.mxu0 0.0
      %536 = vmatpush1.msra.mxu0 %v282
      %537 = vmatprep.subr.mxu0 0.0
      %538 = vmatpush1.msra.mxu0 %v283
      %539 = vmatprep.subr.mxu0 0.0
      %540 = vmatpush1.msra.mxu0 %v284
      %541 = vmatprep.mubr.f32.mxu0 %v176
      %542 = vmatmul.mubr.f32.gmra.mrb[0].mxu0 %v175
      %v543 = vpop.f32.mrb[0].mxu0
      %v544 = vadd.f32 %v469, %v543
      %v545 = vpop.f32.mrb[0].mxu0
      %546 = vmatprep.mubr.f32.mxu0 %v184
      %547 = vmatmul.mubr.f32.gmra.mrb[0].mxu0 %v183
      %v548 = vpop.f32.mrb[0].mxu0
      %v549 = vadd.f32 %v474, %v548
      %v550 = vpop.f32.mrb[0].mxu0
      %551 = vdwg.mxu0
      %552 = vmatprep.subr.mxu0 0.0
      %553 = vmatpush1.msra.mxu0 %v285
      %554 = vmatprep.subr.mxu0 0.0
      %555 = vmatpush1.msra.mxu0 %v286
      %556 = vmatprep.subr.mxu0 0.0
      %557 = vmatpush1.msra.mxu0 %v287
      %558 = vmatprep.subr.mxu0 0.0
      %559 = vmatpush1.msra.mxu0 %v288
      %560 = vmatprep.subr.mxu0 0.0
      %561 = vmatpush1.msra.mxu0 %v289
      %562 = vmatprep.subr.mxu0 0.0
      %563 = vmatpush1.msra.mxu0 %v290
      %564 = vmatprep.subr.mxu0 0.0
      %565 = vmatpush1.msra.mxu0 %v291
      %566 = vmatprep.subr.mxu0 0.0
      %567 = vmatpush1.msra.mxu0 %v292
      %568 = vmatprep.subr.mxu0 0.0
      %569 = vmatpush1.msra.mxu0 %v293
      %570 = vmatprep.subr.mxu0 0.0
      %571 = vmatpush1.msra.mxu0 %v294
      %572 = vmatprep.subr.mxu0 0.0
      %573 = vmatpush1.msra.mxu0 %v295
      %574 = vmatprep.subr.mxu0 0.0
      %575 = vmatpush1.msra.mxu0 %v296
      %576 = vmatprep.subr.mxu0 0.0
      %577 = vmatpush1.msra.mxu0 %v297
      %578 = vmatprep.subr.mxu0 0.0
      %579 = vmatpush1.msra.mxu0 %v298
      %580 = vmatprep.subr.mxu0 0.0
      %581 = vmatpush1.msra.mxu0 %v299
      %582 = vmatprep.subr.mxu0 0.0
      %583 = vmatpush1.msra.mxu0 %v300
      %584 = vmatprep.subr.mxu0 0.0
      %585 = vmatpush1.msra.mxu0 %v301
      %586 = vmatprep.subr.mxu0 0.0
      %587 = vmatpush1.msra.mxu0 %v302
      %588 = vmatprep.subr.mxu0 0.0
      %589 = vmatpush1.msra.mxu0 %v303
      %590 = vmatprep.subr.mxu0 0.0
      %591 = vmatpush1.msra.mxu0 %v304
      %592 = vmatprep.subr.mxu0 0.0
      %593 = vmatpush1.msra.mxu0 %v305
      %594 = vmatprep.subr.mxu0 0.0
      %595 = vmatpush1.msra.mxu0 %v306
      %596 = vmatprep.subr.mxu0 0.0
      %597 = vmatpush1.msra.mxu0 %v307
      %598 = vmatprep.subr.mxu0 0.0
      %599 = vmatpush1.msra.mxu0 %v308
      %600 = vmatprep.subr.mxu0 0.0
      %601 = vmatpush1.msra.mxu0 %v309
      %602 = vmatprep.subr.mxu0 0.0
      %603 = vmatpush1.msra.mxu0 %v310
      %604 = vmatprep.subr.mxu0 0.0
      %605 = vmatpush1.msra.mxu0 %v311
      %606 = vmatprep.subr.mxu0 0.0
      %607 = vmatpush1.msra.mxu0 %v312
      %608 = vmatprep.subr.mxu0 0.0
      %609 = vmatpush1.msra.mxu0 %v313
      %610 = vmatprep.subr.mxu0 0.0
      %611 = vmatpush1.msra.mxu0 %v314
      %612 = vmatprep.subr.mxu0 0.0
      %613 = vmatpush1.msra.mxu0 %v315
      %614 = vmatprep.subr.mxu0 0.0
      %615 = vmatpush1.msra.mxu0 %v316
      %616 = vmatprep.mubr.f32.mxu0 %v178
      %617 = vmatmul.mubr.f32.gmra.mrb[0].mxu0 %v177
      %v618 = vpop.f32.mrb[0].mxu0
      %v619 = vadd.f32 %v544, %v618
      %v620 = vpop.f32.mrb[0].mxu0
      %621 = vmatprep.mubr.f32.mxu0 %v186
      %622 = vmatmul.mubr.f32.gmra.mrb[0].mxu0 %v185
      %v623 = vpop.f32.mrb[0].mxu0
      %v624 = vadd.f32 %v549, %v623
      %v625 = vpop.f32.mrb[0].mxu0
      %626 = vdwg.mxu0
      %vm627 = vcmask 523264
      %628 = vst.msk [vmem:[%s170] sm:$0xff] %vm627, %v619
      %629 = vst.msk [vmem:[%s170 + $0x8] sm:$0xff] %vm627, %v624
      %p630 = scmp.lt.s32.totalorder %s14, 1
      %s631 = scalar_select %p630, %s14, 1
      %s632 = smul.addr %s631, 2
      %s633 = smul.addr %s632, 8
      %s634 = scalar_lea.vmem %s3, %s633
      // Predicated region
      $region33: #{cnn_attention_reduce.1} parent=31 // pred_check
        %p635 = pneg %p100
      $region34: #{cnn_attention_reduce.1} parent=31 // pred_check_branch
        %637 = sbr.rel (%p635) target = $region36
      $region35: #{cnn_attention_reduce.1} parent=31 // pred_region
        _
      $region36: #{cnn_attention_reduce.1} parent=31 // pred_fallthru
        _
    $region32: #{cnn_attention_reduce.1} parent=5 // pred_fallthru
      _
    %p638 = scmp.le.s32.totalorder 2, %s9
    // Predicated region
    $region37: #{cnn_attention_reduce.1} parent=5 // pred_check
      %p639 = pneg %p638
    $region38: #{cnn_attention_reduce.1} parent=5 // pred_check_branch
      %641 = sbr.rel (%p639) target = $region40
    $region39: #{cnn_attention_reduce.1} parent=5 // pred_region
      %s642 = ssub.s32 %s9, 2
      // Predicated region
      $region41: #{cnn_attention_reduce.1} parent=39 // pred_check
        %p643 = pneg %p106
      $region42: #{cnn_attention_reduce.1} parent=39 // pred_check_branch
        %645 = sbr.rel (%p643) target = $region44
      $region43: #{cnn_attention_reduce.1} parent=39 // pred_region
        %p646 = scmp.lt.s32.totalorder %s15, 1
        %s647 = scalar_select %p646, %s15, 1
        %s648 = smul.addr %s647, 2
        %s649 = smul.addr %s648, 8
        %s650 = scalar_lea.vmem %s3, %s649
      $region44: #{cnn_attention_reduce.1} parent=39 // pred_fallthru
        _
    $region40: #{cnn_attention_reduce.1} parent=5 // pred_fallthru
      _
  $region6: #{cnn_attention_reduce.1} parent=0 // loop_footer
    %s13 = sadd.s32 1, %s9
  $region7: #{cnn_attention_reduce.1} parent=0 // loop_footer_branch
    %8 = sbr.rel target = $region3
  $region8: #{cnn_attention_reduce.1} parent=0 // loop_exit
    _

</llo_original>
